<compile_context>
chip_gen: v7x
topology: tpu7x:2x2x1
jax: 0.10.0
libtpu: 0.0.40
codegen_flags: <defaults>
</compile_context>

<pallas_src>
from functools import partial

import jax
import jax.numpy as jnp
from jax.experimental import pallas as pl
from jax.experimental.pallas import tpu as pltpu

_LANE = 128
_SUB = 16  # sublane row padding for the resident bf16 skill table


# ---------------------------------------------------------------------------
# Fused kernel: per batch-tile
#   1) emb_question = where(mask, mean({self} U skill-neighbors), emb_q)
#      (neighbor gather done in-kernel: one-hot(ids) @ emb_s on the MXU)
#   2) scores[b]    = E_b @ E_b^T   (contracting-dim einsum, no transpose)
# TODO(synk): multi-hop `self.aggregate` (agg_hops=3) is undefined in the
#             source module; a one-hop mean over {self} U {skill nbrs} is used.
# ---------------------------------------------------------------------------
def _fused_kernel(emb_q_ref, nbid_ref, mask_ref, emb_s_ref,
                  out_emb_ref, out_scr_ref):
    eq_bf = emb_q_ref[...]                          # (TB, S, Dp) bf16
    eq = eq_bf.astype(jnp.float32)                  # upcast once (v5e-safe VALU)
    ids = nbid_ref[...]                             # (TB, S, Nq) int32
    m = mask_ref[...]                               # (TB, S, 1)  f32 in {0,1}

    TB, S, Dp = eq.shape
    nq = ids.shape[2]
    NSp = emb_s_ref.shape[0]

    # ---- hot path 1: in-kernel neighbor gather via one-hot @ MXU ----------
    # counts[b,s,k] = #{ j : ids[b,s,j] == k }  (lane-dense over padded skills)
    iota = jax.lax.broadcasted_iota(jnp.int32, (TB, S, NSp), 2)
    counts = jnp.zeros((TB, S, NSp), jnp.float32)
    for j in range(nq):                             # nq is tiny & static
        counts = counts + (ids[:, :, j:j + 1] == iota).astype(jnp.float32)
    nb_sum = jnp.dot(counts.reshape(TB * S, NSp).astype(jnp.bfloat16),
                     emb_s_ref[...],
                     preferred_element_type=jnp.float32).reshape(TB, S, Dp)

    agg = (eq + nb_sum) * (1.0 / float(nq + 1))     # multiply by reciprocal
    out_emb_ref[...] = jnp.where(m > 0.5, agg, eq)  # single VPU select

    # ---- hot path 2: product scores, contracting dim d of both operands ----
    out_scr_ref[...] = jnp.einsum('bqd,bkd->bqk', eq_bf, eq_bf,
                                  preferred_element_type=jnp.float32)


def _pick_tile_b(B, S, Dp, nq):
    """Largest divisor of B whose blocks stay under a modest VMEM budget and
    give >= ~1K rows of work per grid step (amortize the ~0.35us step cost)."""
    budget = 4 << 20            # per-step block bytes (Pallas double-buffers)
    target_rows = 1024
    per_row = 2 * Dp + 4 * nq + 4 + 4 * Dp + 4 * S   # in(bf16)+ids+mask+out+scores
    best = 1
    for tb in range(1, B + 1):
        if B % tb:
            continue
        if tb * S * per_row <= budget:
            best = tb
        if tb * S >= target_rows:
            break
    return best


def fused_agg_scores(emb_q_bf, nb_ids, mask_f, emb_s_bf):
    B, S, Dp = emb_q_bf.shape
    Nq = nb_ids.shape[2]
    NSp = emb_s_bf.shape[0]
    TB = _pick_tile_b(B, S, Dp, Nq)
    # TODO(synk): for very large S (>~1k) additionally tile the (S,S) score
    #             output over (q,k) blocks to stay inside v7x's 64 MiB VMEM.
    return pl.pallas_call(
        _fused_kernel,
        out_shape=(jax.ShapeDtypeStruct((B, S, Dp), jnp.float32),
                   jax.ShapeDtypeStruct((B, S, S), jnp.float32)),
        grid=(B // TB,),
        in_specs=[
            pl.BlockSpec((TB, S, Dp), lambda b: (b, 0, 0)),   # emb_q (bf16)
            pl.BlockSpec((TB, S, Nq), lambda b: (b, 0, 0)),   # neighbor ids
            pl.BlockSpec((TB, S, 1), lambda b: (b, 0, 0)),    # mask
            pl.BlockSpec((NSp, Dp), lambda b: (0, 0)),        # emb_s: resident
        ],
        out_specs=[
            pl.BlockSpec((TB, S, Dp), lambda b: (b, 0, 0)),   # emb_question
            pl.BlockSpec((TB, S, S), lambda b: (b, 0, 0)),    # scores
        ],
        compiler_params=pltpu.CompilerParams(
            dimension_semantics=("parallel",)),               # megacore sharding
    )(emb_q_bf, nb_ids, mask_f, emb_s_bf)


# ---------------------------------------------------------------------------
# Parameter init (deterministic, synthetic; no checkpoint loading).
# Embedding tables are stored lane-padded to 128 (zero padding) so every
# kernel block / output is lane-dense; logical emb_dim is recovered by slicing.
# ---------------------------------------------------------------------------
def init_params(key, num_question, num_skill, num_q2, num_u, emb_dim,
                q_nb, s_nb, q_nb_u, u_nb):
    Dp = max(_LANE, ((emb_dim + _LANE - 1) // _LANE) * _LANE)
    NSp = ((num_skill + _SUB - 1) // _SUB) * _SUB
    ks = jax.random.split(key, 10)
    scale = 1.0 / jnp.sqrt(jnp.float32(emb_dim))

    def padded(k, n, rows_pad=None):
        w = jax.random.normal(k, (n, emb_dim), jnp.float32) * scale
        rp = n if rows_pad is None else rows_pad
        return jnp.zeros((rp, Dp), jnp.float32).at[:n, :emb_dim].set(w)

    return {
        "emb_q":  padded(ks[0], num_question),
        "emb_s":  padded(ks[1], num_skill, NSp),   # row-padded; resident in VMEM
        "emb_u":  padded(ks[2], num_u),
        "emb_q2": padded(ks[3], num_q2),
        "emb_r":  padded(ks[4], 2),
        "q_neighbors":   jax.random.randint(ks[5], (num_question, q_nb), 0, num_skill),
        "s_neighbors":   jax.random.randint(ks[6], (num_skill, s_nb), 0, num_question),
        "q_neighbors_u": jax.random.randint(ks[7], (num_q2, q_nb_u), 0, num_u),
        "u_neighbors":   jax.random.randint(ks[8], (num_u, u_nb), 0, num_q2),
        "qs_table": (jax.random.uniform(ks[9], (num_question, num_skill)) < 0.2
                     ).astype(jnp.float32),
    }


# ---------------------------------------------------------------------------
# Forward wrapper (glue gathers in JAX, hot paths in the fused Pallas kernel)
# ---------------------------------------------------------------------------
@partial(jax.jit, static_argnames=("emb_dim",))
def tm_forward(params, question, response, mask, user, *, emb_dim):
    B, S = question.shape

    # glue: id/embedding gathers (data-dependent indexing stays in XLA)
    emb_q_bf = params["emb_q"][question].astype(jnp.bfloat16)     # (B,S,Dp)
    nb_ids = params["q_neighbors"][question]                      # (B,S,Nq)
    mask_f = mask.astype(jnp.float32)[..., None]                  # (B,S,1)
    emb_s_bf = params["emb_s"].astype(jnp.bfloat16)               # (NSp,Dp)
    emb_resp = params["emb_r"][response][..., :emb_dim]           # (B,S,D)

    emb_question_p, scores = fused_agg_scores(emb_q_bf, nb_ids, mask_f, emb_s_bf)
    emb_question = emb_question_p[..., :emb_dim]

    # soft recap: row t+1 of `scores` is bmm(emb(question), emb(q_next)) for
    # every key; the original restricts keys to history question[:, 0:t], so
    # mask out self / future keys before top-k.
    qi = jnp.arange(S)[:, None]
    ki = jnp.arange(S)[None, :]
    valid = ki < (qi - 1)
    k = min(10, S)
    _, topk_idx = jax.lax.top_k(
        jnp.where(valid[None], scores, jnp.finfo(jnp.float32).min), k)   # (B,S,k)

    # TODO(synk): LSTMCell state update, state_history and self.predict are
    #             undefined in the source module; y_hat beyond t=0 cannot be
    #             reproduced (only y_hat[:, 0] = 0.5 is well defined).
    y_hat = jnp.zeros((B, S), jnp.float32).at[:, 0].set(0.5)
    return y_hat, emb_question, scores, topk_idx, emb_resp


if __name__ == "__main__":
    B, S, D = 2, 8, 32
    num_question, num_skill, num_q2, num_u = 50, 20, 50, 30
    q_nb, s_nb, q_nb_u, u_nb = 4, 5, 4, 3

    key = jax.random.PRNGKey(0)
    kp, kq, kr, km, ku = jax.random.split(key, 5)

    params = init_params(kp, num_question, num_skill, num_q2, num_u, D,
                         q_nb, s_nb, q_nb_u, u_nb)

    question = jax.random.randint(kq, (B, S), 0, num_question)
    response = jax.random.randint(kr, (B, S), 0, 2)
    mask = jax.random.randint(km, (B, S), 0, 2)
    user = jax.random.randint(ku, (B, S), 0, num_u)

    outs = tm_forward(params, question, response, mask, user, emb_dim=D)
    outs = jax.block_until_ready(outs)
    y_hat, emb_question, scores, topk_idx, emb_resp = outs

    # pure-JAX reference built from the same bf16-quantized inputs
    eq = params["emb_q"][question].astype(jnp.bfloat16).astype(jnp.float32)
    es = params["emb_s"].astype(jnp.bfloat16).astype(jnp.float32)
    nb_sum = es[params["q_neighbors"][question]].sum(axis=2)
    ref_emb = jnp.where((mask == 1)[..., None],
                        (eq + nb_sum) / (q_nb + 1), eq)[..., :D]
    ref_scores = jnp.einsum('bqd,bkd->bqk', eq, eq)

    assert y_hat.shape == (B, S)
    assert emb_question.shape == (B, S, D)
    assert scores.shape == (B, S, S)
    assert topk_idx.shape == (B, S, min(10, S))
    assert emb_resp.shape == (B, S, D)
    assert jnp.allclose(emb_question, ref_emb, rtol=1e-2, atol=1e-2)
    assert jnp.allclose(scores, ref_scores, rtol=1e-2, atol=1e-2)
    print("KERNEL_OK")
</pallas_src>

<mosaic_0001>
module attributes {stable_mosaic.version = 11 : i64} {
  func.func @_fused_kernel(%arg0: i32, %arg1: memref<2x8x128xbf16, #tpu.memory_space<vmem>>, %arg2: memref<2x8x4xi32, #tpu.memory_space<vmem>>, %arg3: memref<2x8x1xf32, #tpu.memory_space<vmem>>, %arg4: memref<32x128xbf16, #tpu.memory_space<vmem>>, %arg5: memref<2x8x128xf32, #tpu.memory_space<vmem>>, %arg6: memref<2x8x8xf32, #tpu.memory_space<vmem>>) attributes {dimension_semantics = [#tpu.dimension_semantics<parallel>], iteration_bounds = array<i64: 1>, scalar_prefetch = 0 : i64, scratch_operands = 0 : i64, tpu.core_type = #tpu.core_type<tc>, window_params = [{transform_indices = @transform_0, window_bounds = array<i64: 2, 8, 128>}, {transform_indices = @transform_1, window_bounds = array<i64: 2, 8, 4>}, {transform_indices = @transform_2, window_bounds = array<i64: 2, 8, 1>}, {pipeline_mode = #tpu.pipeline_mode<synchronous>, transform_indices = @transform_3, window_bounds = array<i64: 32, 128>}, {transform_indices = @transform_4, window_bounds = array<i64: 2, 8, 128>}, {transform_indices = @transform_5, window_bounds = array<i64: 2, 8, 8>}]} {
    %c0 = arith.constant 0 : index
    %c0_0 = arith.constant 0 : index
    %c0_1 = arith.constant 0 : index
    %0 = vector.load %arg1[%c0, %c0_0, %c0_1] : memref<2x8x128xbf16, #tpu.memory_space<vmem>>, vector<2x8x128xbf16>
    %1 = arith.extf %0 : vector<2x8x128xbf16> to vector<2x8x128xf32>
    %c0_2 = arith.constant 0 : index
    %c0_3 = arith.constant 0 : index
    %c0_4 = arith.constant 0 : index
    %2 = vector.load %arg2[%c0_2, %c0_3, %c0_4] : memref<2x8x4xi32, #tpu.memory_space<vmem>>, vector<2x8x4xi32>
    %c0_5 = arith.constant 0 : index
    %c0_6 = arith.constant 0 : index
    %c0_7 = arith.constant 0 : index
    %3 = vector.load %arg3[%c0_5, %c0_6, %c0_7] : memref<2x8x1xf32, #tpu.memory_space<vmem>>, vector<2x8x1xf32>
    %4 = tpu.iota {dimensions = array<i32: 2>} : vector<2x8x32xi32>
    %cst = arith.constant 0.000000e+00 : f32
    %5 = vector.broadcast %cst : f32 to vector<2x8x32xf32>
    %6 = vector.extract_strided_slice %2 {offsets = [0, 0, 0], sizes = [2, 8, 1], strides = [1, 1, 1]} : vector<2x8x4xi32> to vector<2x8x1xi32>
    %7 = vector.broadcast %6 : vector<2x8x1xi32> to vector<2x8x32xi32>
    %8 = arith.cmpi eq, %7, %4 : vector<2x8x32xi32>
    %9 = arith.extui %8 : vector<2x8x32xi1> to vector<2x8x32xi32>
    %10 = arith.sitofp %9 : vector<2x8x32xi32> to vector<2x8x32xf32>
    %11 = arith.addf %5, %10 : vector<2x8x32xf32>
    %12 = vector.extract_strided_slice %2 {offsets = [0, 0, 1], sizes = [2, 8, 1], strides = [1, 1, 1]} : vector<2x8x4xi32> to vector<2x8x1xi32>
    %13 = vector.broadcast %12 : vector<2x8x1xi32> to vector<2x8x32xi32>
    %14 = arith.cmpi eq, %13, %4 : vector<2x8x32xi32>
    %15 = arith.extui %14 : vector<2x8x32xi1> to vector<2x8x32xi32>
    %16 = arith.sitofp %15 : vector<2x8x32xi32> to vector<2x8x32xf32>
    %17 = arith.addf %11, %16 : vector<2x8x32xf32>
    %18 = vector.extract_strided_slice %2 {offsets = [0, 0, 2], sizes = [2, 8, 1], strides = [1, 1, 1]} : vector<2x8x4xi32> to vector<2x8x1xi32>
    %19 = vector.broadcast %18 : vector<2x8x1xi32> to vector<2x8x32xi32>
    %20 = arith.cmpi eq, %19, %4 : vector<2x8x32xi32>
    %21 = arith.extui %20 : vector<2x8x32xi1> to vector<2x8x32xi32>
    %22 = arith.sitofp %21 : vector<2x8x32xi32> to vector<2x8x32xf32>
    %23 = arith.addf %17, %22 : vector<2x8x32xf32>
    %24 = vector.extract_strided_slice %2 {offsets = [0, 0, 3], sizes = [2, 8, 1], strides = [1, 1, 1]} : vector<2x8x4xi32> to vector<2x8x1xi32>
    %25 = vector.broadcast %24 : vector<2x8x1xi32> to vector<2x8x32xi32>
    %26 = arith.cmpi eq, %25, %4 : vector<2x8x32xi32>
    %27 = arith.extui %26 : vector<2x8x32xi1> to vector<2x8x32xi32>
    %28 = arith.sitofp %27 : vector<2x8x32xi32> to vector<2x8x32xf32>
    %29 = arith.addf %23, %28 : vector<2x8x32xf32>
    %30 = vector.shape_cast %29 : vector<2x8x32xf32> to vector<16x32xf32>
    %31 = arith.truncf %30 : vector<16x32xf32> to vector<16x32xbf16>
    %c0_8 = arith.constant 0 : index
    %c0_9 = arith.constant 0 : index
    %32 = vector.load %arg4[%c0_8, %c0_9] : memref<32x128xbf16, #tpu.memory_space<vmem>>, vector<32x128xbf16>
    %cst_10 = arith.constant dense<0.000000e+00> : vector<16x128xf32>
    %33 = tpu.matmul %31, %32, %cst_10 {dimension_numbers = #tpu.dot_dimension_numbers<[1], [0], [0], [1], [0, 0, 1, 1], [], []>} : vector<16x32xbf16>, vector<32x128xbf16>, vector<16x128xf32> -> vector<16x128xf32>
    %34 = vector.shape_cast %33 : vector<16x128xf32> to vector<2x8x128xf32>
    %35 = arith.addf %1, %34 : vector<2x8x128xf32>
    %cst_11 = arith.constant 2.000000e-01 : f32
    %36 = vector.broadcast %cst_11 : f32 to vector<2x8x128xf32>
    %37 = arith.mulf %35, %36 : vector<2x8x128xf32>
    %cst_12 = arith.constant 5.000000e-01 : f32
    %38 = vector.broadcast %cst_12 : f32 to vector<2x8x1xf32>
    %39 = arith.cmpf ogt, %3, %38 : vector<2x8x1xf32>
    %40 = vector.shape_cast %39 : vector<2x8x1xi1> to vector<2x8x1xi1>
    %41 = vector.broadcast %40 : vector<2x8x1xi1> to vector<2x8x128xi1>
    %42 = arith.select %41, %37, %1 : vector<2x8x128xi1>, vector<2x8x128xf32>
    %c0_13 = arith.constant 0 : index
    %c0_14 = arith.constant 0 : index
    %c0_15 = arith.constant 0 : index
    %43 = vector.load %arg5[%c0_13, %c0_14, %c0_15] : memref<2x8x128xf32, #tpu.memory_space<vmem>>, vector<2x8x128xf32>
    tpu.vector_store %arg5[%c0_13, %c0_14, %c0_15], %42 {strides = array<i32>} : memref<2x8x128xf32, #tpu.memory_space<vmem>>, vector<2x8x128xf32>,
    "tpu.trace_start"() <{level = 10 : i32, message = "bqd,bkd->bqk"}> : () -> ()
    %cst_16 = arith.constant dense<0.000000e+00> : vector<2x8x8xf32>
    %44 = tpu.matmul %0, %0, %cst_16 {dimension_numbers = #tpu.dot_dimension_numbers<[2], [2], [1], [1], [0, 0, 0, 1, 1, 1], [0], [0]>} : vector<2x8x128xbf16>, vector<2x8x128xbf16>, vector<2x8x8xf32> -> vector<2x8x8xf32>
    "tpu.trace_stop"() : () -> ()
    %c0_17 = arith.constant 0 : index
    %c0_18 = arith.constant 0 : index
    %c0_19 = arith.constant 0 : index
    %45 = vector.load %arg6[%c0_17, %c0_18, %c0_19] : memref<2x8x8xf32, #tpu.memory_space<vmem>>, vector<2x8x8xf32>
    tpu.vector_store %arg6[%c0_17, %c0_18, %c0_19], %44 {strides = array<i32>} : memref<2x8x8xf32, #tpu.memory_space<vmem>>, vector<2x8x8xf32>,
    return
  }
  func.func @transform_0(%arg0: i32) -> (i32, i32, i32) {
    %c0_i32 = arith.constant 0 : i32
    %c0_i32_0 = arith.constant 0 : i32
    %c0_i32_1 = arith.constant 0 : i32
    return %arg0, %c0_i32, %c0_i32_0 : i32, i32, i32
  }
  func.func @transform_1(%arg0: i32) -> (i32, i32, i32) {
    %c0_i32 = arith.constant 0 : i32
    %c0_i32_0 = arith.constant 0 : i32
    %c0_i32_1 = arith.constant 0 : i32
    return %arg0, %c0_i32, %c0_i32_0 : i32, i32, i32
  }
  func.func @transform_2(%arg0: i32) -> (i32, i32, i32) {
    %c0_i32 = arith.constant 0 : i32
    %c0_i32_0 = arith.constant 0 : i32
    %c0_i32_1 = arith.constant 0 : i32
    return %arg0, %c0_i32, %c0_i32_0 : i32, i32, i32
  }
  func.func @transform_3(%arg0: i32) -> (i32, i32) {
    %c0_i32 = arith.constant 0 : i32
    %c0_i32_0 = arith.constant 0 : i32
    %c0_i32_1 = arith.constant 0 : i32
    return %c0_i32, %c0_i32_0 : i32, i32
  }
  func.func @transform_4(%arg0: i32) -> (i32, i32, i32) {
    %c0_i32 = arith.constant 0 : i32
    %c0_i32_0 = arith.constant 0 : i32
    %c0_i32_1 = arith.constant 0 : i32
    return %arg0, %c0_i32, %c0_i32_0 : i32, i32, i32
  }
  func.func @transform_5(%arg0: i32) -> (i32, i32, i32) {
    %c0_i32 = arith.constant 0 : i32
    %c0_i32_0 = arith.constant 0 : i32
    %c0_i32_1 = arith.constant 0 : i32
    return %arg0, %c0_i32, %c0_i32_0 : i32, i32, i32
  }
}

</mosaic_0001>

<llo_original>
// kernel: tm_forward.1
$region0: #{tm_forward.1}
  #allocation0 [shape = 'u32[]', space=smem, size = 0x4, offset = 0x4, fixed_abs, tag = 'smem constant byte address 0x4 - core index']
  #allocation1 [shape = 'u32[144,128]{1,0:T(1,128)}', space=vmem, size = 0x12000, scoped, tag = 'internal scratch']
  %s0 = inlined_call_operand.vmem [shape: bf16[2,8,128], index: 0, kind: input, shape index: {}]
  %s1 = inlined_call_operand.vmem [shape: s32[2,8,4], index: 1, kind: input, shape index: {}]
  %s2 = inlined_call_operand.vmem [shape: f32[2,8,1], index: 2, kind: input, shape index: {}]
  %s3 = inlined_call_operand.vmem [shape: bf16[32,128], index: 3, kind: input, shape index: {}]
  %s4 = inlined_call_operand.hbm [shape: f32[2,8,128], index: 4, kind: output, shape index: {0}]
  %s5 = inlined_call_operand.vmem [shape: f32[2,8,8], index: 5, kind: output, shape index: {1}]
  %6 = xla_tuple %s4, %s5
  %s7 = sld [smem:[#allocation0]]
  $region34: #{tm_forward.1} parent=0
    _
  %s9 = ssub.s32 1, %s7
  %s10 = scalar_select 0, %s9, %s7
  $region1: #{tm_forward.1} parent=0
    #allocation2 [shape = 'u8[8192]{0}', space=vmem, size = 0x2000, scoped, tag = 'output window, operand 0, single buffered']
    #allocation3 [shape = 's32[1]{0}', space=sflag, size = 0x4, scoped, tag = 'scoped memory for tm_forward.1']
    %11 = vsyncpa [#allocation3], 0
    // Predicated region
    $region2: #{tm_forward.1} parent=1 // pred_check
      _
    $region3: #{tm_forward.1} parent=1 // pred_check_branch
      %13 = sbr.rel (0) target = $region5
    $region4: #{tm_forward.1} parent=1 // pred_region
      _
    $region5: #{tm_forward.1} parent=1 // pred_fallthru
      _
    // Predicated region
    $region6: #{tm_forward.1} parent=1 // pred_check
      _
    $region7: #{tm_forward.1} parent=1 // pred_check_branch
      %15 = sbr.rel (0) target = $region9
    $region8: #{tm_forward.1} parent=1 // pred_region
      _
    $region9: #{tm_forward.1} parent=1 // pred_fallthru
      _
    // Predicated region
    $region10: #{tm_forward.1} parent=1 // pred_check
      _
    $region11: #{tm_forward.1} parent=1 // pred_check_branch
      %17 = sbr.rel (0) target = $region13
    $region12: #{tm_forward.1} parent=1 // pred_region
      _
    $region13: #{tm_forward.1} parent=1 // pred_fallthru
      _
    // Predicated region
    $region14: #{tm_forward.1} parent=1 // pred_check
      _
    $region15: #{tm_forward.1} parent=1 // pred_check_branch
      %19 = sbr.rel (0) target = $region17
    $region16: #{tm_forward.1} parent=1 // pred_region
      _
    $region17: #{tm_forward.1} parent=1 // pred_fallthru
      _
    %v21 = vld [vmem:[%s0] sm:$0xf]
    %v22 = vld [vmem:[%s0 + $0x4] sm:$0xf]
    %v23 = vunpack.c.l.bf16 %v21
    %v24 = vunpack.c.l.bf16 %v22
    %v25 = vld [vmem:[%s1] sm:$0xff]
    %v26 = vld [vmem:[%s1 + $0x8] sm:$0xff]
    %v27 = vld [vmem:[%s2] sm:$0xff]
    %v28 = vld [vmem:[%s2 + $0x8] sm:$0xff]
    %v29 = vlaneseq
    %v30 = vand.u32 %v29, 127
    %31 = vset.pattern.permute.xlu0 0
    %32 = vperm.xlu0 %31, %v25
    %v33 = vpop.permute.xlu0 %32
    %34 = vset.pattern.permute.xlu0 0
    %35 = vperm.xlu0 %34, %v26
    %v36 = vpop.permute.xlu0 %35
    %vm37 = vcmp.eq.s32.totalorder %v33, %v30
    %vm38 = vcmp.eq.s32.totalorder %v36, %v30
    %v39 = vsel %vm37, 1, 0
    %v40 = vsel %vm38, 1, 0
    %v41 = vcvt.s32.f32 %v39
    %v42 = vcvt.s32.f32 %v40
    %v43 = vadd.f32 %v41, 0.0
    %v44 = vadd.f32 %v42, 0.0
    %45 = vset.pattern.permute.xlu0 1
    %46 = vperm.xlu0 %45, %v25
    %v47 = vpop.permute.xlu0 %46
    %48 = vset.pattern.permute.xlu0 1
    %49 = vperm.xlu0 %48, %v26
    %v50 = vpop.permute.xlu0 %49
    %vm51 = vcmp.eq.s32.totalorder %v47, %v30
    %vm52 = vcmp.eq.s32.totalorder %v50, %v30
    %v53 = vsel %vm51, 1, 0
    %v54 = vsel %vm52, 1, 0
    %v55 = vcvt.s32.f32 %v53
    %v56 = vcvt.s32.f32 %v54
    %v57 = vadd.f32 %v43, %v55
    %v58 = vadd.f32 %v44, %v56
    %59 = vset.pattern.permute.xlu0 2
    %60 = vperm.xlu0 %59, %v25
    %v61 = vpop.permute.xlu0 %60
    %62 = vset.pattern.permute.xlu0 2
    %63 = vperm.xlu0 %62, %v26
    %v64 = vpop.permute.xlu0 %63
    %vm65 = vcmp.eq.s32.totalorder %v61, %v30
    %vm66 = vcmp.eq.s32.totalorder %v64, %v30
    %v67 = vsel %vm65, 1, 0
    %v68 = vsel %vm66, 1, 0
    %v69 = vcvt.s32.f32 %v67
    %v70 = vcvt.s32.f32 %v68
    %v71 = vadd.f32 %v57, %v69
    %v72 = vadd.f32 %v58, %v70
    %73 = vset.pattern.permute.xlu0 3
    %74 = vperm.xlu0 %73, %v25
    %v75 = vpop.permute.xlu0 %74
    %76 = vset.pattern.permute.xlu0 3
    %77 = vperm.xlu0 %76, %v26
    %v78 = vpop.permute.xlu0 %77
    %vm79 = vcmp.eq.s32.totalorder %v75, %v30
    %vm80 = vcmp.eq.s32.totalorder %v78, %v30
    %v81 = vsel %vm79, 1, 0
    %v82 = vsel %vm80, 1, 0
    %v83 = vcvt.s32.f32 %v81
    %v84 = vcvt.s32.f32 %v82
    %v85 = vadd.f32 %v71, %v83
    %v86 = vadd.f32 %v72, %v84
    %v87 = vpack.c.bf16 %v86, %v85
    %v88 = vld [vmem:[%s3] sm:$0xf]
    %v89 = vld [vmem:[%s3 + $0x4] sm:$0xf]
    %v90 = vld [vmem:[%s3 + $0x8] sm:$0xf]
    %v91 = vld [vmem:[%s3 + $0xc] sm:$0xf]
    %v96 = vunpack.c.l.b16 %v88
    %v97 = vunpack.c.l.b16 %v89
    %v98 = vunpack.c.l.b16 %v90
    %v99 = vunpack.c.l.b16 %v91
    %v100 = vpack.c.b16 %v97, %v96
    %v101 = vpack.c.b16 %v99, %v98
    %vm104 = vcmask 261120
    %v106 = vsel %vm104, %v87, 0
    %108 = vmatprep.subr.bf16.mxu0 0
    %109 = vmatpush1.bf16.msra.mxu0 %v100
    %110 = vmatprep.subr.bf16.mxu0 0
    %111 = vmatpush1.bf16.msra.mxu0 %v101
    %112 = vmatprep.subr.bf16.mxu0 0
    %113 = vmatpush1.bf16.msra.mxu0 0
    %114 = vmatprep.subr.bf16.mxu0 0
    %115 = vmatpush1.bf16.msra.mxu0 0
    %116 = vmatprep.subr.bf16.mxu0 0
    %117 = vmatpush1.bf16.msra.mxu0 0
    %118 = vmatprep.subr.bf16.mxu0 0
    %119 = vmatpush1.bf16.msra.mxu0 0
    %120 = vmatprep.subr.bf16.mxu0 0
    %121 = vmatpush1.bf16.msra.mxu0 0
    %122 = vmatprep.subr.bf16.mxu0 0
    %123 = vmatpush1.bf16.msra.mxu0 0
    %124 = vmatprep.subr.bf16.mxu0 0
    %125 = vmatpush1.bf16.msra.mxu0 0
    %126 = vmatprep.subr.bf16.mxu0 0
    %127 = vmatpush1.bf16.msra.mxu0 0
    %128 = vmatprep.subr.bf16.mxu0 0
    %129 = vmatpush1.bf16.msra.mxu0 0
    %130 = vmatprep.subr.bf16.mxu0 0
    %131 = vmatpush1.bf16.msra.mxu0 0
    %132 = vmatprep.subr.bf16.mxu0 0
    %133 = vmatpush1.bf16.msra.mxu0 0
    %134 = vmatprep.subr.bf16.mxu0 0
    %135 = vmatpush1.bf16.msra.mxu0 0
    %136 = vmatprep.subr.bf16.mxu0 0
    %137 = vmatpush1.bf16.msra.mxu0 0
    %138 = vmatprep.subr.bf16.mxu0 0
    %139 = vmatpush1.bf16.msra.mxu0 0
    %140 = vmatprep.mubr.bf16.mxu0 0
    %141 = vmatmul.mubr.bf16.gmra.mrb[0].mxu0 %v106
    %v142 = vpop.f32.mrb[0].mxu0
    %v143 = vadd.f32 0.0, %v142
    %v144 = vpop.f32.mrb[0].mxu0
    %v145 = vpop.f32.mrb[0].mxu0
    %v146 = vadd.f32 0.0, %v145
    %v147 = vpop.f32.mrb[0].mxu0
    %148 = vdwg.mxu0
    %v149 = vadd.f32 %v23, %v143
    %v150 = vadd.f32 %v24, %v146
    %v151 = vmul.f32 %v149, 0.2
    %v152 = vmul.f32 %v150, 0.2
    %vm153 = vcmp.gt.f32.partialorder %v27, 0.5
    %vm154 = vcmp.gt.f32.partialorder %v28, 0.5
    %v155 = vsel %vm153, 1, 0
    %v156 = vsel %vm154, 1, 0
    %157 = vset.pattern.permute.xlu0 0
    %158 = vperm.xlu0 %157, %v155
    %v159 = vpop.permute.xlu0 %158
    %160 = vset.pattern.permute.xlu0 0
    %161 = vperm.xlu0 %160, %v156
    %v162 = vpop.permute.xlu0 %161
    %vm163 = vcmp.eq.s32.totalorder %v159, 1
    %vm164 = vcmp.eq.s32.totalorder %v162, 1
    %v165 = vsel %vm163, %v151, %v23
    %v166 = vsel %vm164, %v152, %v24
    %167 = vst [vmem:[#allocation2] sm:$0xff] %v165
    %168 = vst [vmem:[#allocation2 + $0x8] sm:$0xff] %v166
    %169 = vmatprep.subr.bf16.mxu0 0
    %170 = vmatpush1.bf16.xpose.msra.mxu0 %v21
    %171 = vmatprep.subr.bf16.mxu0 0
    %172 = vmatpush1.bf16.xpose.msra.mxu0 0
    %173 = vmatprep.subr.bf16.mxu0 0
    %174 = vmatpush1.bf16.xpose.msra.mxu0 0
    %175 = vmatprep.subr.bf16.mxu0 0
    %176 = vmatpush1.bf16.xpose.msra.mxu0 0
    %177 = vmatprep.subr.bf16.mxu0 0
    %178 = vmatpush1.bf16.xpose.msra.mxu0 0
    %179 = vmatprep.subr.bf16.mxu0 0
    %180 = vmatpush1.bf16.xpose.msra.mxu0 0
    %181 = vmatprep.subr.bf16.mxu0 0
    %182 = vmatpush1.bf16.xpose.msra.mxu0 0
    %183 = vmatprep.subr.bf16.mxu0 0
    %184 = vmatpush1.bf16.xpose.msra.mxu0 0
    %185 = vmatprep.subr.bf16.mxu0 0
    %186 = vmatpush1.bf16.xpose.msra.mxu0 0
    %187 = vmatprep.subr.bf16.mxu0 0
    %188 = vmatpush1.bf16.xpose.msra.mxu0 0
    %189 = vmatprep.subr.bf16.mxu0 0
    %190 = vmatpush1.bf16.xpose.msra.mxu0 0
    %191 = vmatprep.subr.bf16.mxu0 0
    %192 = vmatpush1.bf16.xpose.msra.mxu0 0
    %193 = vmatprep.subr.bf16.mxu0 0
    %194 = vmatpush1.bf16.xpose.msra.mxu0 0
    %195 = vmatprep.subr.bf16.mxu0 0
    %196 = vmatpush1.bf16.xpose.msra.mxu0 0
    %197 = vmatprep.subr.bf16.mxu0 0
    %198 = vmatpush1.bf16.xpose.msra.mxu0 0
    %199 = vmatprep.subr.bf16.mxu0 0
    %200 = vmatpush1.bf16.xpose.msra.mxu0 0
    %201 = vmatprep.mubr.bf16.mxu0 0
    %202 = vmatmul.mubr.bf16.gmra.mrb[0].mxu0 %v21
    %v203 = vpop.f32.mrb[0].mxu0
    %v204 = vadd.f32 0.0, %v203
    %v205 = vpop.f32.mrb[0].mxu0
    %v206 = vpop.f32.mrb[0].mxu0
    %v207 = vpop.f32.mrb[0].mxu0
    %208 = vdwg.mxu0
    %209 = vmatprep.subr.bf16.mxu0 0
    %210 = vmatpush1.bf16.xpose.msra.mxu0 %v22
    %211 = vmatprep.subr.bf16.mxu0 0
    %212 = vmatpush1.bf16.xpose.msra.mxu0 0
    %213 = vmatprep.subr.bf16.mxu0 0
    %214 = vmatpush1.bf16.xpose.msra.mxu0 0
    %215 = vmatprep.subr.bf16.mxu0 0
    %216 = vmatpush1.bf16.xpose.msra.mxu0 0
    %217 = vmatprep.subr.bf16.mxu0 0
    %218 = vmatpush1.bf16.xpose.msra.mxu0 0
    %219 = vmatprep.subr.bf16.mxu0 0
    %220 = vmatpush1.bf16.xpose.msra.mxu0 0
    %221 = vmatprep.subr.bf16.mxu0 0
    %222 = vmatpush1.bf16.xpose.msra.mxu0 0
    %223 = vmatprep.subr.bf16.mxu0 0
    %224 = vmatpush1.bf16.xpose.msra.mxu0 0
    %225 = vmatprep.subr.bf16.mxu0 0
    %226 = vmatpush1.bf16.xpose.msra.mxu0 0
    %227 = vmatprep.subr.bf16.mxu0 0
    %228 = vmatpush1.bf16.xpose.msra.mxu0 0
    %229 = vmatprep.subr.bf16.mxu0 0
    %230 = vmatpush1.bf16.xpose.msra.mxu0 0
    %231 = vmatprep.subr.bf16.mxu0 0
    %232 = vmatpush1.bf16.xpose.msra.mxu0 0
    %233 = vmatprep.subr.bf16.mxu0 0
    %234 = vmatpush1.bf16.xpose.msra.mxu0 0
    %235 = vmatprep.subr.bf16.mxu0 0
    %236 = vmatpush1.bf16.xpose.msra.mxu0 0
    %237 = vmatprep.subr.bf16.mxu0 0
    %238 = vmatpush1.bf16.xpose.msra.mxu0 0
    %239 = vmatprep.subr.bf16.mxu0 0
    %240 = vmatpush1.bf16.xpose.msra.mxu0 0
    %241 = vmatprep.mubr.bf16.mxu0 0
    %242 = vmatmul.mubr.bf16.gmra.mrb[0].mxu0 %v22
    %v243 = vpop.f32.mrb[0].mxu0
    %v244 = vadd.f32 0.0, %v243
    %v245 = vpop.f32.mrb[0].mxu0
    %v246 = vpop.f32.mrb[0].mxu0
    %v247 = vpop.f32.mrb[0].mxu0
    %248 = vdwg.mxu0
    %vm249 = vcmask 64512
    %250 = vst.msk [vmem:[%s5] sm:$0xff] %vm249, %v204
    %251 = vst.msk [vmem:[%s5 + $0x8] sm:$0xff] %vm249, %v244
    // Predicated region
    $region18: #{tm_forward.1} parent=1 // pred_check
      _
    $region19: #{tm_forward.1} parent=1 // pred_check_branch
      %253 = sbr.rel (0) target = $region21
    $region20: #{tm_forward.1} parent=1 // pred_region
      %s255 = ssub.s32 256, 256
      %256 = vsyncadd [#allocation3], %s255
      %s257 = sshll.u32 [#allocation2], 4
      %s258 = int_to_ptr.vmem [resolvable:$true] %s257
      %263 = dma.vmem_to_hbm [thread:$0]  %s258, 256, %s4, [#allocation3], 128, 128, 8
    $region21: #{tm_forward.1} parent=1 // pred_fallthru
      _
    // Predicated region
    $region22: #{tm_forward.1} parent=1 // pred_check
      _
    $region23: #{tm_forward.1} parent=1 // pred_check_branch
      %265 = sbr.rel (0) target = $region25
    $region24: #{tm_forward.1} parent=1 // pred_region
      _
    $region25: #{tm_forward.1} parent=1 // pred_fallthru
      _
    // Predicated region
    $region26: #{tm_forward.1} parent=1 // pred_check
      _
    $region27: #{tm_forward.1} parent=1 // pred_check_branch
      %267 = sbr.rel (0) target = $region29
    $region28: #{tm_forward.1} parent=1 // pred_region
      %268 = dma.done [#allocation3], 256
    $region29: #{tm_forward.1} parent=1 // pred_fallthru
      _
    // Predicated region
    $region30: #{tm_forward.1} parent=1 // pred_check
      _
    $region31: #{tm_forward.1} parent=1 // pred_check_branch
      %270 = sbr.rel (0) target = $region33
    $region32: #{tm_forward.1} parent=1 // pred_region
      _
    $region33: #{tm_forward.1} parent=1 // pred_fallthru
      _
    %271 = vsyncpa [#allocation3], 1

</llo_original>
